<compile_context>
chip_gen: v6e
topology: v6e:2x2x1
jax: 0.10.0
libtpu: 0.0.40
codegen_flags: <defaults>
</compile_context>

<pallas_src>
import functools

import jax
import jax.numpy as jnp
from jax.experimental import pallas as pl
from jax.experimental.pallas import tpu as pltpu

_LANES = 128
_SUBLANES = 8


def _focal_loss_kernel(pred_ref, gt_ref, out_ref, loss_acc, npos_acc, *,
                       tile_rows, num_inner, valid_rows, needs_mask):
    c = pl.program_id(0)   # "parallel" split axis (megacore on v7x)
    i = pl.program_id(1)   # "arbitrary" reduction axis

    @pl.when(i == 0)
    def _():
        loss_acc[...] = jnp.zeros_like(loss_acc)
        npos_acc[...] = jnp.zeros_like(npos_acc)

    pred = pred_ref[...].astype(jnp.float32)
    gt = gt_ref[...].astype(jnp.float32)

    if needs_mask:
        # Guard the (at most one) partial or clamped-duplicate trailing tile:
        # rows past `valid_rows` are replaced by sentinels (pred=0.5, gt=2.0)
        # which contribute exactly zero and keep the log finite.
        row0 = (c * num_inner + i) * tile_rows
        rows = row0 + jax.lax.broadcasted_iota(
            jnp.int32, (tile_rows, _LANES), 0)
        valid = rows < valid_rows
        pred = jnp.where(valid, pred, 0.5)
        gt = jnp.where(valid, gt, 2.0)

    is_pos = gt == 1.0
    pos_f = is_pos.astype(jnp.float32)
    neg_f = (gt < 1.0).astype(jnp.float32)

    one_m_gt = 1.0 - gt
    omg2 = one_m_gt * one_m_gt
    neg_w = omg2 * omg2                      # (1 - gt)**4 as two squarings

    # Single-log fused form: select the log argument and fold weights +
    # indicators so each element costs exactly one EUP log.
    x = jnp.where(is_pos, pred, 1.0 - pred)
    w = jnp.where(is_pos, 1.0, neg_w * neg_f)
    one_m_x = 1.0 - x
    contrib = jnp.log(x) * (one_m_x * one_m_x) * w

    # Pure-VPU partial reduction into vreg-shaped (8, 128) accumulators; the
    # sublane/lane collapse is deferred to the JAX side.
    groups = tile_rows // _SUBLANES
    loss_acc[...] += jnp.sum(
        contrib.reshape(groups, _SUBLANES, _LANES), axis=0)
    npos_acc[...] += jnp.sum(
        pos_f.reshape(groups, _SUBLANES, _LANES), axis=0)

    @pl.when(i == pl.num_programs(1) - 1)
    def _():
        out_ref[0, 0, :, :] = loss_acc[...]
        out_ref[0, 1, :, :] = npos_acc[...]


def focal_loss(pred, gt, *, tile_rows=4096, num_splits=2):
    """Equivalent of FocalLoss().forward(pred, gt) for NCHW inputs.

    num_splits=2 lets both TensorCores of a v7x chip stream HBM; it is
    near-neutral on single-TC chips (v5e/v6e), where num_splits=1 also works.
    """
    assert pred.shape == gt.shape
    n = pred.size

    pred_is = jnp.dtype(pred.dtype).itemsize
    gt_is = jnp.dtype(gt.dtype).itemsize
    min_is = min(pred_is, gt_is)
    sub = _SUBLANES * max(1, 4 // min_is)      # 8 rows f32, 16 bf16, 32 int8

    lane_rows = -(-n // _LANES)
    padded_rows = -(-lane_rows // sub) * sub   # layout-minimal row padding
    padded_n = padded_rows * _LANES

    pred_flat = pred.reshape(-1)
    gt_flat = gt.reshape(-1)
    pad = padded_n - n
    if pad:
        # Only when n is not already a multiple of sub*128 (< sub*128 extra
        # elements).  Sentinels (pred=0.5, gt=2.0) contribute exactly zero.
        pred_flat = jnp.concatenate(
            [pred_flat, jnp.full((pad,), 0.5, pred_flat.dtype)])
        gt_flat = jnp.concatenate(
            [gt_flat, jnp.full((pad,), 2.0, gt_flat.dtype)])

    # Keep native dtype (no wrapper f32 upcast); kernel casts per tile.
    pred2d = pred_flat.reshape(padded_rows, _LANES)
    gt2d = gt_flat.reshape(padded_rows, _LANES)

    # Effective tile: shrink for small inputs, keep sublane-aligned.
    tr = min(tile_rows, max(sub, -(-padded_rows // num_splits)))
    tr = -(-tr // sub) * sub

    num_tiles = -(-padded_rows // tr)
    splits = max(1, min(num_splits, num_tiles))
    num_inner = -(-num_tiles // splits)

    # Mask only when the grid over-covers the array (partial trailing tile or
    # a clamped duplicate tile from the split); otherwise run the clean path.
    needs_mask = (splits * num_inner * tr != padded_rows)

    if needs_mask:
        def in_map(c, i):
            return (jnp.minimum(c * num_inner + i, num_tiles - 1), 0)
    else:
        def in_map(c, i):
            return (c * num_inner + i, 0)

    kernel = functools.partial(
        _focal_loss_kernel,
        tile_rows=tr, num_inner=num_inner,
        valid_rows=padded_rows, needs_mask=needs_mask)

    cost = pl.CostEstimate(
        flops=16 * padded_n,
        transcendentals=padded_n,
        bytes_accessed=padded_n * (pred_is + gt_is)
                       + splits * 2 * _SUBLANES * _LANES * 4,
    )

    # 2 inputs x 2 pipeline buffers; raise the scoped-VMEM limit only if a
    # user-requested tile would exceed v5e's 16 MiB default.
    vmem_needed = 2 * 2 * tr * _LANES * max(pred_is, gt_is) + (1 << 20)
    vmem_limit = min(vmem_needed, 64 << 20) if vmem_needed > (16 << 20) else None

    partials = pl.pallas_call(
        kernel,
        out_shape=jax.ShapeDtypeStruct(
            (splits, 2, _SUBLANES, _LANES), jnp.float32),
        grid_spec=pltpu.PrefetchScalarGridSpec(
            num_scalar_prefetch=0,
            grid=(splits, num_inner),
            in_specs=[
                pl.BlockSpec((tr, _LANES), in_map),
                pl.BlockSpec((tr, _LANES), in_map),
            ],
            out_specs=pl.BlockSpec((1, 2, _SUBLANES, _LANES),
                                   lambda c, i: (c, 0, 0, 0)),
            scratch_shapes=[pltpu.VMEM((_SUBLANES, _LANES), jnp.float32)] * 2,
        ),
        compiler_params=pltpu.CompilerParams(
            dimension_semantics=("parallel", "arbitrary"),
            vmem_limit_bytes=vmem_limit,
        ),
        cost_estimate=cost,
    )(pred2d, gt2d)

    total_loss = jnp.sum(partials[:, 0])
    num_pos = jnp.sum(partials[:, 1])

    # loss = -neg_loss if num_pos == 0 else -(pos_loss + neg_loss) / num_pos
    # (pos_loss == 0 whenever num_pos == 0, so total_loss suffices.)
    return jnp.where(num_pos == 0.0,
                     -total_loss,
                     -total_loss / jnp.maximum(num_pos, 1.0))


def _reference_focal_loss(pred, gt):
    pred = pred.astype(jnp.float32)
    gt = gt.astype(jnp.float32)
    pos_inds = (gt == 1.0).astype(jnp.float32)
    neg_inds = (gt < 1.0).astype(jnp.float32)
    neg_weights = (1.0 - gt) ** 4
    pos_loss = jnp.log(pred) * (1.0 - pred) ** 2 * pos_inds
    neg_loss = jnp.log(1.0 - pred) * pred ** 2 * neg_weights * neg_inds
    num_pos = pos_inds.sum()
    pos_loss = pos_loss.sum()
    neg_loss = neg_loss.sum()
    return jnp.where(num_pos == 0.0,
                     -neg_loss,
                     -(pos_loss + neg_loss) / jnp.maximum(num_pos, 1.0))


def _make_inputs(key, shape, dtype=jnp.float32):
    k1, k2, k3 = jax.random.split(key, 3)
    # pred: heatmap predictions in (0, 1), as out of a sigmoid (kept away from
    # {0,1} so bf16 rounding never produces exact endpoints).
    pred = jax.nn.sigmoid(jax.random.normal(k1, shape, jnp.float32))
    pred = jnp.clip(pred, 0.05, 0.95)
    # gt: Gaussian-splat style ground truth in [0, 1) with some exact 1.0 peaks.
    gt = jax.random.uniform(k2, shape, jnp.float32, 0.0, 0.95)
    peak = jax.random.uniform(k3, shape) > 0.97
    gt = jnp.where(peak, 1.0, gt)
    return pred.astype(dtype), gt.astype(dtype)


if __name__ == "__main__":
    key = jax.random.PRNGKey(0)
    k0, k1, k2 = jax.random.split(key, 3)

    # 1) Default path: NCHW f32, n divides 8*128 -> no padding, no masking.
    pred, gt = _make_inputs(k0, (2, 4, 16, 16))
    loss = focal_loss(pred, gt)
    jax.block_until_ready(loss)
    ref = _reference_focal_loss(pred, gt)
    assert jnp.allclose(loss, ref, rtol=1e-5, atol=1e-5), (loss, ref)

    # 2) Partial trailing tile + clamped duplicate tile (in-kernel row mask).
    pred2, gt2 = _make_inputs(k1, (2, 4, 16, 40))
    loss2 = focal_loss(pred2, gt2, tile_rows=16, num_splits=2)
    jax.block_until_ready(loss2)
    ref2 = _reference_focal_loss(pred2, gt2)
    assert jnp.allclose(loss2, ref2, rtol=1e-5, atol=1e-5), (loss2, ref2)

    # 3) bf16 streaming + lane-pad path (n not a multiple of 128).
    pred3, gt3 = _make_inputs(k2, (2, 3, 5, 7), dtype=jnp.bfloat16)
    loss3 = focal_loss(pred3, gt3)
    jax.block_until_ready(loss3)
    ref3 = _reference_focal_loss(pred3, gt3)
    assert jnp.allclose(loss3, ref3, rtol=1e-4, atol=1e-5), (loss3, ref3)

    print("KERNEL_OK")
</pallas_src>

<mosaic_0001>
module attributes {stable_mosaic.version = 11 : i64} {
  func.func @_focal_loss_kernel(%arg0: i32, %arg1: i32, %arg2: memref<8x128xf32, #tpu.memory_space<vmem>>, %arg3: memref<8x128xf32, #tpu.memory_space<vmem>>, %arg4: memref<1x2x8x128xf32, #tpu.memory_space<vmem>>, %arg5: memref<8x128xf32, #tpu.memory_space<vmem>>, %arg6: memref<8x128xf32, #tpu.memory_space<vmem>>) attributes {dimension_semantics = [#tpu.dimension_semantics<parallel>, #tpu.dimension_semantics<arbitrary>], iteration_bounds = array<i64: 2, 1>, scalar_prefetch = 0 : i64, scratch_operands = 2 : i64, tpu.core_type = #tpu.core_type<tc>, window_params = [{transform_indices = @transform_0, window_bounds = array<i64: 8, 128>}, {transform_indices = @transform_1, window_bounds = array<i64: 8, 128>}, {transform_indices = @transform_2, window_bounds = array<i64: 1, 2, 8, 128>}]} {
    %c0_i32 = arith.constant 0 : i32
    %0 = arith.cmpi eq, %arg1, %c0_i32 : i32
    %1 = arith.extui %0 : i1 to i32
    %c0_i32_0 = arith.constant 0 : i32
    %2 = arith.cmpi ne, %1, %c0_i32_0 : i32
    scf.if %2 {
      %cst_21 = arith.constant 0.000000e+00 : f32
      %42 = vector.broadcast %cst_21 : f32 to vector<8x128xf32>
      %c0_22 = arith.constant 0 : index
      %c0_23 = arith.constant 0 : index
      %43 = vector.load %arg5[%c0_22, %c0_23] : memref<8x128xf32, #tpu.memory_space<vmem>>, vector<8x128xf32>
      tpu.vector_store %arg5[%c0_22, %c0_23], %42 {strides = array<i32>} : memref<8x128xf32, #tpu.memory_space<vmem>>, vector<8x128xf32>,
      %cst_24 = arith.constant 0.000000e+00 : f32
      %44 = vector.broadcast %cst_24 : f32 to vector<8x128xf32>
      %c0_25 = arith.constant 0 : index
      %c0_26 = arith.constant 0 : index
      %45 = vector.load %arg6[%c0_25, %c0_26] : memref<8x128xf32, #tpu.memory_space<vmem>>, vector<8x128xf32>
      tpu.vector_store %arg6[%c0_25, %c0_26], %44 {strides = array<i32>} : memref<8x128xf32, #tpu.memory_space<vmem>>, vector<8x128xf32>,
    } else {
    }
    %c0 = arith.constant 0 : index
    %c0_1 = arith.constant 0 : index
    %3 = vector.load %arg2[%c0, %c0_1] : memref<8x128xf32, #tpu.memory_space<vmem>>, vector<8x128xf32>
    %c0_2 = arith.constant 0 : index
    %c0_3 = arith.constant 0 : index
    %4 = vector.load %arg3[%c0_2, %c0_3] : memref<8x128xf32, #tpu.memory_space<vmem>>, vector<8x128xf32>
    %cst = arith.constant 1.000000e+00 : f32
    %5 = vector.broadcast %cst : f32 to vector<8x128xf32>
    %6 = arith.cmpf oeq, %4, %5 : vector<8x128xf32>
    %7 = arith.extui %6 : vector<8x128xi1> to vector<8x128xi32>
    %8 = arith.sitofp %7 : vector<8x128xi32> to vector<8x128xf32>
    %cst_4 = arith.constant 1.000000e+00 : f32
    %9 = vector.broadcast %cst_4 : f32 to vector<8x128xf32>
    %10 = arith.cmpf olt, %4, %9 : vector<8x128xf32>
    %11 = arith.extui %10 : vector<8x128xi1> to vector<8x128xi32>
    %12 = arith.sitofp %11 : vector<8x128xi32> to vector<8x128xf32>
    %cst_5 = arith.constant 1.000000e+00 : f32
    %13 = vector.broadcast %cst_5 : f32 to vector<8x128xf32>
    %14 = arith.subf %13, %4 : vector<8x128xf32>
    %15 = arith.mulf %14, %14 : vector<8x128xf32>
    %16 = arith.mulf %15, %15 : vector<8x128xf32>
    %cst_6 = arith.constant 1.000000e+00 : f32
    %17 = vector.broadcast %cst_6 : f32 to vector<8x128xf32>
    %18 = arith.subf %17, %3 : vector<8x128xf32>
    %19 = arith.select %6, %3, %18 : vector<8x128xi1>, vector<8x128xf32>
    %20 = arith.mulf %16, %12 : vector<8x128xf32>
    %cst_7 = arith.constant 1.000000e+00 : f32
    %21 = vector.broadcast %cst_7 : f32 to vector<8x128xf32>
    %22 = arith.select %6, %21, %20 : vector<8x128xi1>, vector<8x128xf32>
    %cst_8 = arith.constant 1.000000e+00 : f32
    %23 = vector.broadcast %cst_8 : f32 to vector<8x128xf32>
    %24 = arith.subf %23, %19 : vector<8x128xf32>
    %25 = math.log %19 : vector<8x128xf32>
    %26 = arith.mulf %24, %24 : vector<8x128xf32>
    %27 = arith.mulf %25, %26 : vector<8x128xf32>
    %28 = arith.mulf %27, %22 : vector<8x128xf32>
    %c0_9 = arith.constant 0 : index
    %c0_10 = arith.constant 0 : index
    %29 = vector.load %arg5[%c0_9, %c0_10] : memref<8x128xf32, #tpu.memory_space<vmem>>, vector<8x128xf32>
    %30 = vector.shape_cast %28 : vector<8x128xf32> to vector<1x8x128xf32>
    %cst_11 = arith.constant dense<0.000000e+00> : vector<8x128xf32>
    %31 = vector.multi_reduction <add>, %30, %cst_11 [0] : vector<1x8x128xf32> to vector<8x128xf32>
    %32 = arith.addf %29, %31 : vector<8x128xf32>
    %c0_12 = arith.constant 0 : index
    %c0_13 = arith.constant 0 : index
    %33 = vector.load %arg5[%c0_12, %c0_13] : memref<8x128xf32, #tpu.memory_space<vmem>>, vector<8x128xf32>
    tpu.vector_store %arg5[%c0_12, %c0_13], %32 {strides = array<i32>} : memref<8x128xf32, #tpu.memory_space<vmem>>, vector<8x128xf32>,
    %c0_14 = arith.constant 0 : index
    %c0_15 = arith.constant 0 : index
    %34 = vector.load %arg6[%c0_14, %c0_15] : memref<8x128xf32, #tpu.memory_space<vmem>>, vector<8x128xf32>
    %35 = vector.shape_cast %8 : vector<8x128xf32> to vector<1x8x128xf32>
    %cst_16 = arith.constant dense<0.000000e+00> : vector<8x128xf32>
    %36 = vector.multi_reduction <add>, %35, %cst_16 [0] : vector<1x8x128xf32> to vector<8x128xf32>
    %37 = arith.addf %34, %36 : vector<8x128xf32>
    %c0_17 = arith.constant 0 : index
    %c0_18 = arith.constant 0 : index
    %38 = vector.load %arg6[%c0_17, %c0_18] : memref<8x128xf32, #tpu.memory_space<vmem>>, vector<8x128xf32>
    tpu.vector_store %arg6[%c0_17, %c0_18], %37 {strides = array<i32>} : memref<8x128xf32, #tpu.memory_space<vmem>>, vector<8x128xf32>,
    %c0_i32_19 = arith.constant 0 : i32
    %39 = arith.cmpi eq, %arg1, %c0_i32_19 : i32
    %40 = arith.extui %39 : i1 to i32
    %c0_i32_20 = arith.constant 0 : i32
    %41 = arith.cmpi ne, %40, %c0_i32_20 : i32
    scf.if %41 {
      %c0_21 = arith.constant 0 : index
      %c0_22 = arith.constant 0 : index
      %42 = vector.load %arg5[%c0_21, %c0_22] : memref<8x128xf32, #tpu.memory_space<vmem>>, vector<8x128xf32>
      %c0_23 = arith.constant 0 : index
      %c0_24 = arith.constant 0 : index
      %c0_25 = arith.constant 0 : index
      %c0_26 = arith.constant 0 : index
      %43 = vector.load %arg4[%c0_23, %c0_24, %c0_25, %c0_26] : memref<1x2x8x128xf32, #tpu.memory_space<vmem>>, vector<1x1x8x128xf32>
      %44 = vector.shape_cast %43 : vector<1x1x8x128xf32> to vector<8x128xf32>
      %45 = vector.shape_cast %42 : vector<8x128xf32> to vector<1x1x8x128xf32>
      tpu.vector_store %arg4[%c0_23, %c0_24, %c0_25, %c0_26], %45 {strides = array<i32>} : memref<1x2x8x128xf32, #tpu.memory_space<vmem>>, vector<1x1x8x128xf32>,
      %c0_27 = arith.constant 0 : index
      %c0_28 = arith.constant 0 : index
      %46 = vector.load %arg6[%c0_27, %c0_28] : memref<8x128xf32, #tpu.memory_space<vmem>>, vector<8x128xf32>
      %c0_29 = arith.constant 0 : index
      %c1 = arith.constant 1 : index
      %c0_30 = arith.constant 0 : index
      %c0_31 = arith.constant 0 : index
      %47 = vector.load %arg4[%c0_29, %c1, %c0_30, %c0_31] : memref<1x2x8x128xf32, #tpu.memory_space<vmem>>, vector<1x1x8x128xf32>
      %48 = vector.shape_cast %47 : vector<1x1x8x128xf32> to vector<8x128xf32>
      %49 = vector.shape_cast %46 : vector<8x128xf32> to vector<1x1x8x128xf32>
      tpu.vector_store %arg4[%c0_29, %c1, %c0_30, %c0_31], %49 {strides = array<i32>} : memref<1x2x8x128xf32, #tpu.memory_space<vmem>>, vector<1x1x8x128xf32>,
    } else {
    }
    return
  }
  func.func @transform_0(%arg0: i32, %arg1: i32) -> (i32, i32) {
    %c1_i32 = arith.constant 1 : i32
    %0 = arith.muli %arg0, %c1_i32 : i32
    %1 = arith.addi %0, %arg1 : i32
    %c0_i32 = arith.constant 0 : i32
    %c0_i32_0 = arith.constant 0 : i32
    return %1, %c0_i32 : i32, i32
  }
  func.func @transform_1(%arg0: i32, %arg1: i32) -> (i32, i32) {
    %c1_i32 = arith.constant 1 : i32
    %0 = arith.muli %arg0, %c1_i32 : i32
    %1 = arith.addi %0, %arg1 : i32
    %c0_i32 = arith.constant 0 : i32
    %c0_i32_0 = arith.constant 0 : i32
    return %1, %c0_i32 : i32, i32
  }
  func.func @transform_2(%arg0: i32, %arg1: i32) -> (i32, i32, i32, i32) {
    %c0_i32 = arith.constant 0 : i32
    %c0_i32_0 = arith.constant 0 : i32
    %c0_i32_1 = arith.constant 0 : i32
    %c0_i32_2 = arith.constant 0 : i32
    return %arg0, %c0_i32, %c0_i32_0, %c0_i32_1 : i32, i32, i32, i32
  }
}

</mosaic_0001>

<llo_original>
// kernel: tpu_custom_call.1
$region0: #{tpu_custom_call.1}
  #allocation0 [shape = 'u32[]', space=smem, size = 0x4, offset = 0x4, fixed_abs, tag = 'smem constant byte address 0x4 - core index']
  #allocation1 [shape = 'u32[144,128]{1,0:T(1,128)}', space=vmem, size = 0x12000, scoped, tag = 'internal scratch']
  #allocation2 [shape = 'f32[8,128]{1,0:T(8,128)}', space=vmem, size = 0x1000, scoped, tag = 'scratch operand']
  #allocation3 [shape = 'f32[8,128]{1,0:T(8,128)}', space=vmem, size = 0x1000, scoped, tag = 'scratch operand']
  %s0 = inlined_call_operand.hbm [shape: f32[16,128], index: 0, kind: input, shape index: {}]
  %s1 = inlined_call_operand.hbm [shape: f32[16,128], index: 1, kind: input, shape index: {}]
  %s2 = inlined_call_operand.hbm [shape: f32[2,2,8,128], index: 2, kind: output, shape index: {}]
  %s3 = sld [smem:[#allocation0]]
  $region57: #{tpu_custom_call.1} parent=0
    _
  %s5 = ssub.s32 1, %s3
  %s6 = scalar_select 0, %s5, %s3
  $region1: #{tpu_custom_call.1} parent=0
    #allocation4 [shape = 'u8[8192]{0}', space=vmem, size = 0x2000, scoped, tag = 'input window, operand 0']
    #allocation5 [shape = 's32[2]{0}', space=sflag, size = 0x8, scoped, tag = 'scoped memory for tpu_custom_call.1']
    #allocation6 [shape = 's32[2]{0}', space=sflag, size = 0x8, scoped, tag = 'scoped memory for tpu_custom_call.1']
    #allocation7 [shape = 'u8[8192]{0}', space=vmem, size = 0x2000, scoped, tag = 'input window, operand 1']
    #allocation8 [shape = 's32[2]{0}', space=sflag, size = 0x8, scoped, tag = 'scoped memory for tpu_custom_call.1']
    #allocation9 [shape = 'u8[16384]{0}', space=vmem, size = 0x4000, scoped, tag = 'output window, operand 0']
    %7 = vsyncpa [#allocation5], 0
    %s8 = scalar_lea.sflag [#allocation5], 1
    %9 = vsyncpa %s8, 0
    %10 = vsyncpa [#allocation8], 0
    %s11 = scalar_lea.sflag [#allocation8], 1
    %12 = vsyncpa %s11, 0
    %13 = vsyncpa [#allocation6], 0
    %s14 = scalar_lea.sflag [#allocation6], 1
    %15 = vsyncpa %s14, 0
    loop: start=0, step=1, limit=4
    $region2: #{tpu_custom_call.1} parent=1 // loop_pre_header
      _
    $region3: #{tpu_custom_call.1} parent=1 // loop_header
      %s17 = sphi 0, %s21
      %p18 = scmp.ge.s32.totalorder %s17, 4
      %s24 = sphi 0, %s36
      %s25 = sphi 0, %s32
      %s26 = sphi 0, %s24
      %s27 = sphi 0, %s25
      %s28 = sphi 0, %s26
      %s29 = sphi 0, %s27
      %s41 = sphi 0, %s43
      %s44 = sphi 0, %s41
      %s45 = sphi 0, %s44
      %s61 = sphi 0, %s45
      %s69 = sphi 0, %s71
      %s72 = sphi 0, %s69
      %s73 = sphi 0, %s72
      %s89 = sphi 0, %s73
      %s95 = sphi 0, %s97
      %s98 = sphi 0, %s95
      %s99 = sphi 0, %s98
      %s115 = sphi 0, %s99
    $region4: #{tpu_custom_call.1} parent=1 // loop_header_branch
      %20 = sbr.rel (%p18) target = $region8
    $region5: #{tpu_custom_call.1} parent=1 // loop_body
      %s22 = ssub.s32 %s17, 1
      %s23 = ssub.s32 %s17, 2
      %s30 = sadd.s32 1, %s25
      %p31 = scmp.ge.s32.totalorder %s30, 1
      %s32 = scalar_select %p31, 0, %s30
      %s33 = sadd.s32 1, %s24
      %s34 = scalar_select %p31, %s33, %s24
      %p35 = scmp.ge.s32.totalorder %s34, 2
      %s36 = scalar_select %p35, 0, %s34
      %s37 = sadd.s32 %s24, %s25
      %s38 = sadd.s32 %s36, %s32
      %s39 = ssub.s32 %s37, %s38
      %p40 = scmp.eq.s32.totalorder %s39, 0
      %s42 = sadd.s32 %s41, 1
      %s43 = scalar_select %p40, %s41, %s42
      %p46 = pneg %p40
      %p47 = scmp.eq.s32.totalorder %s17, 1
      %p48 = por %p46, %p47
      %p49 = scmp.ne.s32.totalorder %s41, %s44
      %p50 = scmp.eq.s32.totalorder %s17, 0
      %p51 = por %p49, %p50
      %p52 = scmp.ne.s32.totalorder %s41, %s44
      %p53 = scmp.eq.s32.totalorder %s22, 1
      %p54 = por %p52, %p53
      %p55 = scmp.ne.s32.totalorder %s44, %s45
      %p56 = scmp.eq.s32.totalorder %s22, 0
      %p57 = por %p55, %p56
      %p58 = scmp.ne.s32.totalorder %s44, %s45
      %p59 = scmp.eq.s32.totalorder %s23, 1
      %p60 = por %p58, %p59
      %p62 = scmp.ne.s32.totalorder %s45, %s61
      %p63 = scmp.eq.s32.totalorder %s23, 0
      %p64 = por %p62, %p63
      %s65 = sadd.s32 %s24, %s25
      %s66 = sadd.s32 %s36, %s32
      %s67 = ssub.s32 %s65, %s66
      %p68 = scmp.eq.s32.totalorder %s67, 0
      %s70 = sadd.s32 %s69, 1
      %s71 = scalar_select %p68, %s69, %s70
      %p74 = pneg %p68
      %p75 = scmp.eq.s32.totalorder %s17, 1
      %p76 = por %p74, %p75
      %p77 = scmp.ne.s32.totalorder %s69, %s72
      %p78 = scmp.eq.s32.totalorder %s17, 0
      %p79 = por %p77, %p78
      %p80 = scmp.ne.s32.totalorder %s69, %s72
      %p81 = scmp.eq.s32.totalorder %s22, 1
      %p82 = por %p80, %p81
      %p83 = scmp.ne.s32.totalorder %s72, %s73
      %p84 = scmp.eq.s32.totalorder %s22, 0
      %p85 = por %p83, %p84
      %p86 = scmp.ne.s32.totalorder %s72, %s73
      %p87 = scmp.eq.s32.totalorder %s23, 1
      %p88 = por %p86, %p87
      %p90 = scmp.ne.s32.totalorder %s73, %s89
      %p91 = scmp.eq.s32.totalorder %s23, 0
      %p92 = por %p90, %p91
      %s93 = ssub.s32 %s24, %s36
      %p94 = scmp.eq.s32.totalorder %s93, 0
      %s96 = sadd.s32 %s95, 1
      %s97 = scalar_select %p94, %s95, %s96
      %p100 = pneg %p94
      %p101 = scmp.eq.s32.totalorder %s17, 1
      %p102 = por %p100, %p101
      %p103 = scmp.ne.s32.totalorder %s95, %s98
      %p104 = scmp.eq.s32.totalorder %s17, 0
      %p105 = por %p103, %p104
      %p106 = scmp.ne.s32.totalorder %s95, %s98
      %p107 = scmp.eq.s32.totalorder %s22, 1
      %p108 = por %p106, %p107
      %p109 = scmp.ne.s32.totalorder %s98, %s99
      %p110 = scmp.eq.s32.totalorder %s22, 0
      %p111 = por %p109, %p110
      %p112 = scmp.ne.s32.totalorder %s98, %s99
      %p113 = scmp.eq.s32.totalorder %s23, 1
      %p114 = por %p112, %p113
      %p116 = scmp.ne.s32.totalorder %s99, %s115
      %p117 = scmp.eq.s32.totalorder %s23, 0
      %p118 = por %p116, %p117
      %p119 = scmp.le.s32.totalorder 1, %s17
      %p120 = scmp.lt.s32.totalorder %s17, 3
      %p121 = pnand %p119, %p120
      %p122 = pneg %p121
      // Predicated region
      $region9: #{tpu_custom_call.1} parent=5 // pred_check
        _
      $region10: #{tpu_custom_call.1} parent=5 // pred_check_branch
        %124 = sbr.rel (%p121) target = $region12
      $region11: #{tpu_custom_call.1} parent=5 // pred_region
        %s125 = ssub.s32 %s17, 1
      $region12: #{tpu_custom_call.1} parent=5 // pred_fallthru
        _
      %p126 = scmp.lt.s32.totalorder %s17, 2
      // Predicated region
      $region13: #{tpu_custom_call.1} parent=5 // pred_check
        %p127 = pneg %p126
      $region14: #{tpu_custom_call.1} parent=5 // pred_check_branch
        %129 = sbr.rel (%p127) target = $region16
      $region15: #{tpu_custom_call.1} parent=5 // pred_region
        // Predicated region
        $region17: #{tpu_custom_call.1} parent=15 // pred_check
          %p130 = pneg %p51
        $region18: #{tpu_custom_call.1} parent=15 // pred_check_branch
          %132 = sbr.rel (%p130) target = $region20
        $region19: #{tpu_custom_call.1} parent=15 // pred_region
          %s133 = sand.u32 %s41, 1
          %s134 = scalar_lea.sflag [#allocation5], %s133
          %s135 = sand.u32 %s41, 1
          %s136 = smul.addr %s135, 8
          %s137 = scalar_lea.vmem [#allocation4], %s136
          %s138 = sadd.s32 %s24, %s25
          %s140 = ssub.s32 128, 128
          %141 = vsyncadd %s134, %s140
          %s142 = smul.addr %s138, 128
          %s143 = scalar_lea.hbm %s0, %s142
          %s145 = sshll.u32 %s137, 4
          %s146 = int_to_ptr.vmem [resolvable:$true] %s145
          %148 = dma.hbm_to_vmem [thread:$0]  %s143, 128, %s146, %s134
        $region20: #{tpu_custom_call.1} parent=15 // pred_fallthru
          _
        // Predicated region
        $region21: #{tpu_custom_call.1} parent=15 // pred_check
          %p149 = pneg %p79
        $region22: #{tpu_custom_call.1} parent=15 // pred_check_branch
          %151 = sbr.rel (%p149) target = $region24
        $region23: #{tpu_custom_call.1} parent=15 // pred_region
          %s152 = sand.u32 %s69, 1
          %s153 = scalar_lea.sflag [#allocation8], %s152
          %s154 = sand.u32 %s69, 1
          %s155 = smul.addr %s154, 8
          %s156 = scalar_lea.vmem [#allocation7], %s155
          %s157 = sadd.s32 %s24, %s25
          %s159 = ssub.s32 128, 128
          %160 = vsyncadd %s153, %s159
          %s161 = smul.addr %s157, 128
          %s162 = scalar_lea.hbm %s1, %s161
          %s164 = sshll.u32 %s156, 4
          %s165 = int_to_ptr.vmem [resolvable:$true] %s164
          %167 = dma.hbm_to_vmem [thread:$0]  %s162, 128, %s165, %s153
        $region24: #{tpu_custom_call.1} parent=15 // pred_fallthru
          _
      $region16: #{tpu_custom_call.1} parent=5 // pred_fallthru
        _
      %p168 = scmp.le.s32.totalorder 1, %s17
      %p169 = scmp.lt.s32.totalorder %s17, 3
      %p170 = pnand %p168, %p169
      %p171 = pneg %p170
      // Predicated region
      $region25: #{tpu_custom_call.1} parent=5 // pred_check
        _
      $region26: #{tpu_custom_call.1} parent=5 // pred_check_branch
        %173 = sbr.rel (%p170) target = $region28
      $region27: #{tpu_custom_call.1} parent=5 // pred_region
        %s174 = ssub.s32 %s17, 1
        %s175 = sand.u32 %s44, 1
        %s176 = scalar_lea.sflag [#allocation5], %s175
        %s177 = sand.u32 %s44, 1
        %s178 = smul.addr %s177, 8
        %s179 = scalar_lea.vmem [#allocation4], %s178
        // Predicated region
        $region29: #{tpu_custom_call.1} parent=27 // pred_check
          %p180 = pneg %p57
        $region30: #{tpu_custom_call.1} parent=27 // pred_check_branch
          %182 = sbr.rel (%p180) target = $region32
        $region31: #{tpu_custom_call.1} parent=27 // pred_region
          %183 = dma.done %s176, 128
        $region32: #{tpu_custom_call.1} parent=27 // pred_fallthru
          _
        %s184 = sand.u32 %s72, 1
        %s185 = scalar_lea.sflag [#allocation8], %s184
        %s186 = sand.u32 %s72, 1
        %s187 = smul.addr %s186, 8
        %s188 = scalar_lea.vmem [#allocation7], %s187
        // Predicated region
        $region33: #{tpu_custom_call.1} parent=27 // pred_check
          %p189 = pneg %p85
        $region34: #{tpu_custom_call.1} parent=27 // pred_check_branch
          %191 = sbr.rel (%p189) target = $region36
        $region35: #{tpu_custom_call.1} parent=27 // pred_region
          %192 = dma.done %s185, 128
        $region36: #{tpu_custom_call.1} parent=27 // pred_fallthru
          _
        %s193 = sand.u32 %s44, 1
        %s194 = scalar_lea.sflag [#allocation5], %s193
        %s195 = sand.u32 %s44, 1
        %s196 = smul.addr %s195, 8
        %s197 = scalar_lea.vmem [#allocation4], %s196
        %p198 = pneg %p57
        %p199 = pneg %p54
        %s200 = sand.u32 %s72, 1
        %s201 = scalar_lea.sflag [#allocation8], %s200
        %s202 = sand.u32 %s72, 1
        %s203 = smul.addr %s202, 8
        %s204 = scalar_lea.vmem [#allocation7], %s203
        %p205 = pneg %p85
        %p206 = pneg %p82
        %p207 = pneg %p111
        %p208 = pneg %p108
        %s209 = sand.u32 %s98, 1
        %s210 = scalar_lea.sflag [#allocation6], %s209
        %s211 = sand.u32 %s98, 1
        %s212 = smul.addr %s211, 16
        %s213 = scalar_lea.vmem [#allocation9], %s212
        %s214 = sadd.s32 %s26, %s27
        %s215 = sadd.s32 %s26, %s27
        %p216 = scmp.eq.s32.totalorder %s27, 0
        // Predicated region
        $region37: #{tpu_custom_call.1} parent=27 // pred_check
          %p217 = pneg %p216
        $region38: #{tpu_custom_call.1} parent=27 // pred_check_branch
          %219 = sbr.rel (%p217) target = $region40
        $region39: #{tpu_custom_call.1} parent=27 // pred_region
          %220 = vst [vmem:[#allocation2] sm:$0xff] 0.0
          %221 = vst [vmem:[#allocation3] sm:$0xff] 0.0
        $region40: #{tpu_custom_call.1} parent=27 // pred_fallthru
          _
        %v222 = vld [vmem:[%s179] sm:$0xff]
        %v223 = vld [vmem:[%s188] sm:$0xff]
        %vm224 = vcmp.eq.f32.partialorder %v223, 1.0
        %v225 = vsel %vm224, 1, 0
        %v226 = vcvt.s32.f32 %v225
        %vm227 = vcmp.lt.f32.partialorder %v223, 1.0
        %v228 = vsel %vm227, 1, 0
        %v229 = vcvt.s32.f32 %v228
        %v230 = vsub.f32 1.0, %v223
        %v231 = vmul.f32 %v230, %v230
        %v232 = vmul.f32 %v231, %v231
        %v233 = vsub.f32 1.0, %v222
        %v234 = vsel %vm224, %v222, %v233
        %v235 = vmul.f32 %v232, %v229
        %v236 = vsel %vm224, 1.0, %v235
        %v237 = vsub.f32 1.0, %v234
        %v238 = vlog2.pop %v234
        %v239 = vmul.f32 %v238, 0.6931472
        %v240 = vmul.f32 %v237, %v237
        %v241 = vmul.f32 %v239, %v240
        %v242 = vmul.f32 %v241, %v236
        %v243 = vld [vmem:[#allocation2] sm:$0xff]
        %v244 = vadd.f32 %v242, 0.0
        %v245 = vadd.f32 %v243, %v244
        %246 = vst [vmem:[#allocation2] sm:$0xff] %v245
        %v247 = vld [vmem:[#allocation3] sm:$0xff]
        %v248 = vadd.f32 %v226, 0.0
        %v249 = vadd.f32 %v247, %v248
        %250 = vst [vmem:[#allocation3] sm:$0xff] %v249
        // Predicated region
        $region41: #{tpu_custom_call.1} parent=27 // pred_check
          %p251 = pneg %p216
        $region42: #{tpu_custom_call.1} parent=27 // pred_check_branch
          %253 = sbr.rel (%p251) target = $region44
        $region43: #{tpu_custom_call.1} parent=27 // pred_region
          %v254 = vld [vmem:[#allocation2] sm:$0xff]
          %255 = vst [vmem:[%s213] sm:$0xff] %v254
          %v256 = vld [vmem:[#allocation3] sm:$0xff]
          %s257 = scalar_lea.vmem %s213, 8 [#allocation9]
          %258 = vst [vmem:[%s257] sm:$0xff] %v256
        $region44: #{tpu_custom_call.1} parent=27 // pred_fallthru
          _
        %s259 = sand.u32 %s98, 1
        %s260 = scalar_lea.sflag [#allocation6], %s259
        %s261 = sand.u32 %s98, 1
        %s262 = smul.addr %s261, 16
        %s263 = scalar_lea.vmem [#allocation9], %s262
        // Predicated region
        $region45: #{tpu_custom_call.1} parent=27 // pred_check
          %p264 = pneg %p108
        $region46: #{tpu_custom_call.1} parent=27 // pred_check_branch
          %266 = sbr.rel (%p264) target = $region48
        $region47: #{tpu_custom_call.1} parent=27 // pred_region
          %s268 = ssub.s32 256, 256
          %269 = vsyncadd %s260, %s268
          %s270 = smul.addr %s26, 2
          %s271 = smul.addr %s270, 128
          %s272 = scalar_lea.hbm %s2, %s271
          %s273 = sshll.u32 %s263, 4
          %s274 = int_to_ptr.vmem [resolvable:$true] %s273
          %279 = dma.vmem_to_hbm [thread:$0]  %s274, 256, %s272, %s260, 128, 128, 8
        $region48: #{tpu_custom_call.1} parent=27 // pred_fallthru
          _
      $region28: #{tpu_custom_call.1} parent=5 // pred_fallthru
        _
      %p280 = scmp.le.s32.totalorder 2, %s17
      // Predicated region
      $region49: #{tpu_custom_call.1} parent=5 // pred_check
        %p281 = pneg %p280
      $region50: #{tpu_custom_call.1} parent=5 // pred_check_branch
        %283 = sbr.rel (%p281) target = $region52
      $region51: #{tpu_custom_call.1} parent=5 // pred_region
        %s284 = ssub.s32 %s17, 2
        // Predicated region
        $region53: #{tpu_custom_call.1} parent=51 // pred_check
          %p285 = pneg %p114
        $region54: #{tpu_custom_call.1} parent=51 // pred_check_branch
          %287 = sbr.rel (%p285) target = $region56
        $region55: #{tpu_custom_call.1} parent=51 // pred_region
          %s288 = sand.u32 %s99, 1
          %s289 = scalar_lea.sflag [#allocation6], %s288
          %s290 = sand.u32 %s99, 1
          %s291 = smul.addr %s290, 16
          %s292 = scalar_lea.vmem [#allocation9], %s291
          %293 = dma.done %s289, 256
        $region56: #{tpu_custom_call.1} parent=51 // pred_fallthru
          _
      $region52: #{tpu_custom_call.1} parent=5 // pred_fallthru
        _
    $region6: #{tpu_custom_call.1} parent=1 // loop_footer
      %s21 = sadd.s32 1, %s17
    $region7: #{tpu_custom_call.1} parent=1 // loop_footer_branch
      %16 = sbr.rel target = $region3
    $region8: #{tpu_custom_call.1} parent=1 // loop_exit
      _
    %294 = vsyncpa [#allocation5], 1
    %s295 = scalar_lea.sflag [#allocation5], 1
    %296 = vsyncpa %s295, 1
    %297 = vsyncpa [#allocation8], 1
    %s298 = scalar_lea.sflag [#allocation8], 1
    %299 = vsyncpa %s298, 1
    %300 = vsyncpa [#allocation6], 1
    %s301 = scalar_lea.sflag [#allocation6], 1
    %302 = vsyncpa %s301, 1

</llo_original>
